<compile_context>
chip_gen: v6e
topology: v6e:2x2x1
jax: 0.10.0
libtpu: 0.0.40
codegen_flags: <defaults>
</compile_context>

<pallas_src>
import functools

import jax
import jax.numpy as jnp
from jax.experimental import pallas as pl
from jax.experimental.pallas import tpu as pltpu

_HIDDEN = [256, 512, 256, 64, 1]
_LEAKY_SLOPE = 0.01
# Split into >= 2 (even #) batch tiles once there is this much work, so both
# v7x TensorCores get tiles; costs one extra grid step on single-TC chips.
_MIN_SPLIT_ROWS = 512


def _leaky_relu(v):
    # max(v, a*v) == leaky_relu(v) for slope in (0, 1): single VALU max
    # instead of a compare + select pair.
    return jnp.maximum(v, _LEAKY_SLOPE * v)


def mlp_kernel(x_ref,
               w1_ref, b1_ref,
               w2_ref, b2_ref,
               w3_ref, b3_ref,
               w4_ref, b4_ref,
               w5_ref, b5_ref,
               o_ref, *, bf16_epilogue):
    epi_dtype = jnp.bfloat16 if bf16_epilogue else jnp.float32

    def layer(h_bf16, w_ref, b_ref):
        # bf16 MXU matmul with f32 accumulation.
        acc = jnp.dot(h_bf16, w_ref[...], preferred_element_type=jnp.float32)
        # Bias-add + leaky_relu in epi_dtype (bf16 on v6e/v7x VPU, f32 on v5e);
        # result feeds the next matmul directly.
        h = _leaky_relu(acc.astype(epi_dtype) + b_ref[...])
        return h.astype(jnp.bfloat16)

    h = x_ref[...].astype(jnp.bfloat16)
    h = layer(h, w1_ref, b1_ref)
    h = layer(h, w2_ref, b2_ref)
    h = layer(h, w3_ref, b3_ref)
    # Layer 4 epilogue and layer 5 stay in f32 (final reduction / output path).
    acc4 = jnp.dot(h, w4_ref[...], preferred_element_type=jnp.float32)
    h4 = _leaky_relu(acc4 + b4_ref[...])
    # Layer 5: (TM,64) x (64,) -> (TM,1). N=1 matmul wastes the MXU; use a VPU
    # broadcast-multiply + lane reduction in f32. w5_ref is (1, 64).
    out = jnp.sum(h4 * w5_ref[...], axis=-1, keepdims=True) + b5_ref[...]
    o_ref[...] = out.astype(o_ref.dtype)


def init_mlp_params(key, input_dim, dtype=jnp.float32):
    """Deterministic init mimicking nn.Linear default (uniform +/- 1/sqrt(fan_in))."""
    dims = [input_dim] + _HIDDEN
    params = []
    for i in range(5):
        fan_in, fan_out = dims[i], dims[i + 1]
        key, kw, kb = jax.random.split(key, 3)
        bound = 1.0 / (fan_in ** 0.5)
        # Stored as (in, out): equivalent to PyTorch weight (out, in) transposed.
        w = jax.random.uniform(kw, (fan_in, fan_out), dtype, -bound, bound)
        b = jax.random.uniform(kb, (1, fan_out), dtype, -bound, bound)
        params.append((w, b))
    return params


def _round_up(n, m):
    return ((n + m - 1) // m) * m


def _use_bf16_epilogue():
    # bf16 epilogue only where the VPU is bf16-capable (v6e / v7x); v5e and
    # older keep the f32 epilogue. Detection is perf-only, both are correct.
    try:
        kind = jax.devices()[0].device_kind.lower()
    except Exception:
        return False
    return not any(tag in kind for tag in ("v2", "v3", "v4", "v5"))


def mlp_forward(x, params, *, max_tile=2048):
    batch, input_dim = x.shape
    out_dtype = x.dtype
    bf16_epi = _use_bf16_epilogue()
    epi_dtype = jnp.bfloat16 if bf16_epi else jnp.float32

    # --- batch tiling policy -------------------------------------------------
    # Pick the tile count first, then derive tm, so padding waste is bounded by
    # a few sublanes per tile (not up to a whole tile).
    grid_n = pl.cdiv(batch, max_tile)
    if batch >= _MIN_SPLIT_ROWS and grid_n % 2 == 1:
        grid_n += 1  # >= 2 and even: keeps both v7x TensorCores busy
    tm = _round_up(pl.cdiv(batch, grid_n), 8)
    padded = grid_n * tm
    if padded != batch:  # skip the extra HBM pass when already aligned
        x = jnp.pad(x, ((0, padded - batch), (0, 0)))
    grid = (grid_n,)

    # --- parameter staging ---------------------------------------------------
    (w1, b1), (w2, b2), (w3, b3), (w4, b4), (w5, b5) = params
    # bf16 matmul operands (f32 accumulation in-kernel); final layer stays f32.
    w1b, w2b, w3b, w4b = (w.astype(jnp.bfloat16) for w in (w1, w2, w3, w4))
    b1e, b2e, b3e = (b.astype(epi_dtype) for b in (b1, b2, b3))
    b4f = b4.astype(jnp.float32)
    w5_row = w5.reshape(1, -1).astype(jnp.float32)   # (1, 64)
    b5f = b5.reshape(1, 1).astype(jnp.float32)       # (1, 1)

    flat_args = [x, w1b, b1e, w2b, b2e, w3b, b3e, w4b, b4f, w5_row, b5f]

    def full_spec(a):
        # Whole array resident in VMEM; constant block index -> DMA'd once,
        # not per grid step (weights + biases total ~0.6 MB).
        return pl.BlockSpec(a.shape, lambda i: (0,) * a.ndim)

    in_specs = [pl.BlockSpec((tm, input_dim), lambda i: (i, 0))]
    in_specs += [full_spec(a) for a in flat_args[1:]]
    out_spec = pl.BlockSpec((tm, 1), lambda i: (i, 0))

    dims = [input_dim] + _HIDDEN
    flops = 2 * padded * sum(dims[i] * dims[i + 1] for i in range(5))
    bytes_accessed = (padded * input_dim * 4 + padded * 4 +
                      sum(int(a.size) * a.dtype.itemsize for a in flat_args[1:]))
    cost = pl.CostEstimate(flops=int(flops), transcendentals=0,
                           bytes_accessed=int(bytes_accessed))

    out = pl.pallas_call(
        functools.partial(mlp_kernel, bf16_epilogue=bf16_epi),
        out_shape=jax.ShapeDtypeStruct((padded, 1), out_dtype),
        grid=grid,
        in_specs=in_specs,
        out_specs=out_spec,
        compiler_params=pltpu.CompilerParams(
            dimension_semantics=("parallel",),
            # Peak live VMEM ~10-15 MiB at TM=2048; raise past v5e's 16 MiB
            # default scoped limit, comfortably under every chip's physical.
            vmem_limit_bytes=32 * 1024 * 1024),
        cost_estimate=cost,
    )(*flat_args)

    out = out[:batch]
    # PyTorch `.squeeze()` removes all size-1 dims -> (batch,)
    return jnp.squeeze(out)


def mlp_reference(x, params):
    h = x
    for i, (w, b) in enumerate(params):
        h = h @ w + b
        if i < 4:
            h = jnp.where(h > 0, h, 0.01 * h)
    return jnp.squeeze(h)


if __name__ == "__main__":
    key = jax.random.PRNGKey(0)
    kx, kp = jax.random.split(key)

    batch, input_dim = 2, 32
    x = jax.random.normal(kx, (batch, input_dim), jnp.float32)
    params = init_mlp_params(kp, input_dim)

    y = mlp_forward(x, params)
    jax.block_until_ready(y)

    y_ref = mlp_reference(x, params)
    assert y.shape == (batch,), y.shape
    # bf16 matmul operands / bf16 epilogue (f32 accumulation) -> loosened
    # tolerance vs the pure-f32 reference.
    assert jnp.allclose(y, y_ref, atol=5e-2, rtol=5e-2), (y, y_ref)

    print("KERNEL_OK")
</pallas_src>

<mosaic_0001>
module attributes {stable_mosaic.version = 11 : i64} {
  func.func @mlp_kernel(%arg0: i32, %arg1: memref<8x32xf32, #tpu.memory_space<vmem>>, %arg2: memref<32x256xbf16, #tpu.memory_space<vmem>>, %arg3: memref<1x256xbf16, #tpu.memory_space<vmem>>, %arg4: memref<256x512xbf16, #tpu.memory_space<vmem>>, %arg5: memref<1x512xbf16, #tpu.memory_space<vmem>>, %arg6: memref<512x256xbf16, #tpu.memory_space<vmem>>, %arg7: memref<1x256xbf16, #tpu.memory_space<vmem>>, %arg8: memref<256x64xbf16, #tpu.memory_space<vmem>>, %arg9: memref<1x64xf32, #tpu.memory_space<vmem>>, %arg10: memref<1x64xf32, #tpu.memory_space<vmem>>, %arg11: memref<1x1xf32, #tpu.memory_space<vmem>>, %arg12: memref<8x1xf32, #tpu.memory_space<vmem>>) attributes {dimension_semantics = [#tpu.dimension_semantics<parallel>], iteration_bounds = array<i64: 1>, scalar_prefetch = 0 : i64, scratch_operands = 0 : i64, tpu.core_type = #tpu.core_type<tc>, window_params = [{transform_indices = @transform_0, window_bounds = array<i64: 8, 32>}, {pipeline_mode = #tpu.pipeline_mode<synchronous>, transform_indices = @transform_1, window_bounds = array<i64: 32, 256>}, {pipeline_mode = #tpu.pipeline_mode<synchronous>, transform_indices = @transform_2, window_bounds = array<i64: 1, 256>}, {pipeline_mode = #tpu.pipeline_mode<synchronous>, transform_indices = @transform_3, window_bounds = array<i64: 256, 512>}, {pipeline_mode = #tpu.pipeline_mode<synchronous>, transform_indices = @transform_4, window_bounds = array<i64: 1, 512>}, {pipeline_mode = #tpu.pipeline_mode<synchronous>, transform_indices = @transform_5, window_bounds = array<i64: 512, 256>}, {pipeline_mode = #tpu.pipeline_mode<synchronous>, transform_indices = @transform_6, window_bounds = array<i64: 1, 256>}, {pipeline_mode = #tpu.pipeline_mode<synchronous>, transform_indices = @transform_7, window_bounds = array<i64: 256, 64>}, {pipeline_mode = #tpu.pipeline_mode<synchronous>, transform_indices = @transform_8, window_bounds = array<i64: 1, 64>}, {pipeline_mode = #tpu.pipeline_mode<synchronous>, transform_indices = @transform_9, window_bounds = array<i64: 1, 64>}, {pipeline_mode = #tpu.pipeline_mode<synchronous>, transform_indices = @transform_10, window_bounds = array<i64: 1, 1>}, {transform_indices = @transform_11, window_bounds = array<i64: 8, 1>}]} {
    %c0 = arith.constant 0 : index
    %c0_0 = arith.constant 0 : index
    %0 = vector.load %arg1[%c0, %c0_0] : memref<8x32xf32, #tpu.memory_space<vmem>>, vector<8x32xf32>
    %1 = arith.truncf %0 : vector<8x32xf32> to vector<8x32xbf16>
    %c0_1 = arith.constant 0 : index
    %c0_2 = arith.constant 0 : index
    %2 = vector.load %arg2[%c0_1, %c0_2] : memref<32x256xbf16, #tpu.memory_space<vmem>>, vector<32x256xbf16>
    %cst = arith.constant dense<0.000000e+00> : vector<8x256xf32>
    %3 = tpu.matmul %1, %2, %cst {dimension_numbers = #tpu.dot_dimension_numbers<[1], [0], [0], [1], [0, 0, 1, 1], [], []>} : vector<8x32xbf16>, vector<32x256xbf16>, vector<8x256xf32> -> vector<8x256xf32>
    %4 = arith.truncf %3 : vector<8x256xf32> to vector<8x256xbf16>
    %c0_3 = arith.constant 0 : index
    %c0_4 = arith.constant 0 : index
    %5 = vector.load %arg3[%c0_3, %c0_4] : memref<1x256xbf16, #tpu.memory_space<vmem>>, vector<1x256xbf16>
    %6 = vector.broadcast %5 : vector<1x256xbf16> to vector<8x256xbf16>
    %7 = arith.addf %4, %6 : vector<8x256xbf16>
    %cst_5 = arith.constant 1.000980e-02 : bf16
    %8 = vector.broadcast %cst_5 : bf16 to vector<8x256xbf16>
    %9 = arith.mulf %8, %7 : vector<8x256xbf16>
    %10 = arith.maximumf %7, %9 : vector<8x256xbf16>
    %c0_6 = arith.constant 0 : index
    %c0_7 = arith.constant 0 : index
    %11 = vector.load %arg4[%c0_6, %c0_7] : memref<256x512xbf16, #tpu.memory_space<vmem>>, vector<256x512xbf16>
    %cst_8 = arith.constant dense<0.000000e+00> : vector<8x512xf32>
    %12 = tpu.matmul %10, %11, %cst_8 {dimension_numbers = #tpu.dot_dimension_numbers<[1], [0], [0], [1], [0, 0, 1, 1], [], []>} : vector<8x256xbf16>, vector<256x512xbf16>, vector<8x512xf32> -> vector<8x512xf32>
    %13 = arith.truncf %12 : vector<8x512xf32> to vector<8x512xbf16>
    %c0_9 = arith.constant 0 : index
    %c0_10 = arith.constant 0 : index
    %14 = vector.load %arg5[%c0_9, %c0_10] : memref<1x512xbf16, #tpu.memory_space<vmem>>, vector<1x512xbf16>
    %15 = vector.broadcast %14 : vector<1x512xbf16> to vector<8x512xbf16>
    %16 = arith.addf %13, %15 : vector<8x512xbf16>
    %cst_11 = arith.constant 1.000980e-02 : bf16
    %17 = vector.broadcast %cst_11 : bf16 to vector<8x512xbf16>
    %18 = arith.mulf %17, %16 : vector<8x512xbf16>
    %19 = arith.maximumf %16, %18 : vector<8x512xbf16>
    %c0_12 = arith.constant 0 : index
    %c0_13 = arith.constant 0 : index
    %20 = vector.load %arg6[%c0_12, %c0_13] : memref<512x256xbf16, #tpu.memory_space<vmem>>, vector<512x256xbf16>
    %cst_14 = arith.constant dense<0.000000e+00> : vector<8x256xf32>
    %21 = tpu.matmul %19, %20, %cst_14 {dimension_numbers = #tpu.dot_dimension_numbers<[1], [0], [0], [1], [0, 0, 1, 1], [], []>} : vector<8x512xbf16>, vector<512x256xbf16>, vector<8x256xf32> -> vector<8x256xf32>
    %22 = arith.truncf %21 : vector<8x256xf32> to vector<8x256xbf16>
    %c0_15 = arith.constant 0 : index
    %c0_16 = arith.constant 0 : index
    %23 = vector.load %arg7[%c0_15, %c0_16] : memref<1x256xbf16, #tpu.memory_space<vmem>>, vector<1x256xbf16>
    %24 = vector.broadcast %23 : vector<1x256xbf16> to vector<8x256xbf16>
    %25 = arith.addf %22, %24 : vector<8x256xbf16>
    %cst_17 = arith.constant 1.000980e-02 : bf16
    %26 = vector.broadcast %cst_17 : bf16 to vector<8x256xbf16>
    %27 = arith.mulf %26, %25 : vector<8x256xbf16>
    %28 = arith.maximumf %25, %27 : vector<8x256xbf16>
    %c0_18 = arith.constant 0 : index
    %c0_19 = arith.constant 0 : index
    %29 = vector.load %arg8[%c0_18, %c0_19] : memref<256x64xbf16, #tpu.memory_space<vmem>>, vector<256x64xbf16>
    %cst_20 = arith.constant dense<0.000000e+00> : vector<8x64xf32>
    %30 = tpu.matmul %28, %29, %cst_20 {dimension_numbers = #tpu.dot_dimension_numbers<[1], [0], [0], [1], [0, 0, 1, 1], [], []>} : vector<8x256xbf16>, vector<256x64xbf16>, vector<8x64xf32> -> vector<8x64xf32>
    %c0_21 = arith.constant 0 : index
    %c0_22 = arith.constant 0 : index
    %31 = vector.load %arg9[%c0_21, %c0_22] : memref<1x64xf32, #tpu.memory_space<vmem>>, vector<1x64xf32>
    %32 = vector.broadcast %31 : vector<1x64xf32> to vector<8x64xf32>
    %33 = arith.addf %30, %32 : vector<8x64xf32>
    %cst_23 = arith.constant 0.00999999977 : f32
    %34 = vector.broadcast %cst_23 : f32 to vector<8x64xf32>
    %35 = arith.mulf %34, %33 : vector<8x64xf32>
    %36 = arith.maximumf %33, %35 : vector<8x64xf32>
    %c0_24 = arith.constant 0 : index
    %c0_25 = arith.constant 0 : index
    %37 = vector.load %arg10[%c0_24, %c0_25] : memref<1x64xf32, #tpu.memory_space<vmem>>, vector<1x64xf32>
    %38 = vector.broadcast %37 : vector<1x64xf32> to vector<8x64xf32>
    %39 = arith.mulf %36, %38 : vector<8x64xf32>
    %cst_26 = arith.constant dense<0.000000e+00> : vector<8xf32>
    %40 = vector.multi_reduction <add>, %39, %cst_26 [1] : vector<8x64xf32> to vector<8xf32>
    %41 = vector.shape_cast %40 : vector<8xf32> to vector<8x1xf32>
    %c0_27 = arith.constant 0 : index
    %c0_28 = arith.constant 0 : index
    %42 = vector.load %arg11[%c0_27, %c0_28] : memref<1x1xf32, #tpu.memory_space<vmem>>, vector<1x1xf32>
    %43 = vector.broadcast %42 : vector<1x1xf32> to vector<8x1xf32>
    %44 = arith.addf %41, %43 : vector<8x1xf32>
    %c0_29 = arith.constant 0 : index
    %c0_30 = arith.constant 0 : index
    %45 = vector.load %arg12[%c0_29, %c0_30] : memref<8x1xf32, #tpu.memory_space<vmem>>, vector<8x1xf32>
    tpu.vector_store %arg12[%c0_29, %c0_30], %44 {strides = array<i32>} : memref<8x1xf32, #tpu.memory_space<vmem>>, vector<8x1xf32>,
    return
  }
  func.func @transform_0(%arg0: i32) -> (i32, i32) {
    %c0_i32 = arith.constant 0 : i32
    %c0_i32_0 = arith.constant 0 : i32
    return %arg0, %c0_i32 : i32, i32
  }
  func.func @transform_1(%arg0: i32) -> (i32, i32) {
    %c0_i32 = arith.constant 0 : i32
    %c0_i32_0 = arith.constant 0 : i32
    %c0_i32_1 = arith.constant 0 : i32
    return %c0_i32, %c0_i32_0 : i32, i32
  }
  func.func @transform_2(%arg0: i32) -> (i32, i32) {
    %c0_i32 = arith.constant 0 : i32
    %c0_i32_0 = arith.constant 0 : i32
    %c0_i32_1 = arith.constant 0 : i32
    return %c0_i32, %c0_i32_0 : i32, i32
  }
  func.func @transform_3(%arg0: i32) -> (i32, i32) {
    %c0_i32 = arith.constant 0 : i32
    %c0_i32_0 = arith.constant 0 : i32
    %c0_i32_1 = arith.constant 0 : i32
    return %c0_i32, %c0_i32_0 : i32, i32
  }
  func.func @transform_4(%arg0: i32) -> (i32, i32) {
    %c0_i32 = arith.constant 0 : i32
    %c0_i32_0 = arith.constant 0 : i32
    %c0_i32_1 = arith.constant 0 : i32
    return %c0_i32, %c0_i32_0 : i32, i32
  }
  func.func @transform_5(%arg0: i32) -> (i32, i32) {
    %c0_i32 = arith.constant 0 : i32
    %c0_i32_0 = arith.constant 0 : i32
    %c0_i32_1 = arith.constant 0 : i32
    return %c0_i32, %c0_i32_0 : i32, i32
  }
  func.func @transform_6(%arg0: i32) -> (i32, i32) {
    %c0_i32 = arith.constant 0 : i32
    %c0_i32_0 = arith.constant 0 : i32
    %c0_i32_1 = arith.constant 0 : i32
    return %c0_i32, %c0_i32_0 : i32, i32
  }
  func.func @transform_7(%arg0: i32) -> (i32, i32) {
    %c0_i32 = arith.constant 0 : i32
    %c0_i32_0 = arith.constant 0 : i32
    %c0_i32_1 = arith.constant 0 : i32
    return %c0_i32, %c0_i32_0 : i32, i32
  }
  func.func @transform_8(%arg0: i32) -> (i32, i32) {
    %c0_i32 = arith.constant 0 : i32
    %c0_i32_0 = arith.constant 0 : i32
    %c0_i32_1 = arith.constant 0 : i32
    return %c0_i32, %c0_i32_0 : i32, i32
  }
  func.func @transform_9(%arg0: i32) -> (i32, i32) {
    %c0_i32 = arith.constant 0 : i32
    %c0_i32_0 = arith.constant 0 : i32
    %c0_i32_1 = arith.constant 0 : i32
    return %c0_i32, %c0_i32_0 : i32, i32
  }
  func.func @transform_10(%arg0: i32) -> (i32, i32) {
    %c0_i32 = arith.constant 0 : i32
    %c0_i32_0 = arith.constant 0 : i32
    %c0_i32_1 = arith.constant 0 : i32
    return %c0_i32, %c0_i32_0 : i32, i32
  }
  func.func @transform_11(%arg0: i32) -> (i32, i32) {
    %c0_i32 = arith.constant 0 : i32
    %c0_i32_0 = arith.constant 0 : i32
    return %arg0, %c0_i32 : i32, i32
  }
}

</mosaic_0001>

<llo_original>
// kernel: tpu_custom_call.1
$region0: #{tpu_custom_call.1}
  #allocation0 [shape = 'u32[]', space=smem, size = 0x4, offset = 0x4, fixed_abs, tag = 'smem constant byte address 0x4 - core index']
  #allocation1 [shape = 'u32[144,128]{1,0:T(1,128)}', space=vmem, size = 0x12000, scoped, tag = 'internal scratch']
  #allocation2 [shape = 'f32[1,1]{1,0:T(1,128)S(1)}', space=vmem, size = 0x200, scoped, tag = 'scoped memory for tpu_custom_call.1']
  %s0 = inlined_call_operand.vmem [shape: f32[8,32], index: 0, kind: input, shape index: {}]
  %s1 = inlined_call_operand.vmem [shape: bf16[32,256], index: 1, kind: input, shape index: {}]
  %s2 = inlined_call_operand.vmem [shape: bf16[1,256], index: 2, kind: input, shape index: {}]
  %s3 = inlined_call_operand.hbm [shape: bf16[256,512], index: 3, kind: input, shape index: {}]
  %s4 = inlined_call_operand.vmem [shape: bf16[1,512], index: 4, kind: input, shape index: {}]
  %s5 = inlined_call_operand.hbm [shape: bf16[512,256], index: 5, kind: input, shape index: {}]
  %s6 = inlined_call_operand.vmem [shape: bf16[1,256], index: 6, kind: input, shape index: {}]
  %s7 = inlined_call_operand.vmem [shape: bf16[256,64], index: 7, kind: input, shape index: {}]
  %s8 = inlined_call_operand.vmem [shape: f32[1,64], index: 8, kind: input, shape index: {}]
  %s9 = inlined_call_operand.vmem [shape: f32[1,64], index: 9, kind: input, shape index: {}]
  %s10 = inlined_call_operand.<no memory space> [shape: f32[1,1], index: 10, kind: input, shape index: {}]
  %s11 = inlined_call_operand.vmem [shape: f32[8,1], index: 11, kind: output, shape index: {}]
  %s12 = sld [smem:[#allocation0]]
  $region62: #{tpu_custom_call.1} parent=0
    _
  %s14 = ssub.s32 1, %s12
  %s15 = scalar_select 0, %s14, %s12
  %v16 = vstv %s10
  %17 = vst [vmem:[#allocation2] sm:$0x1] %v16
  $region1: #{tpu_custom_call.1} parent=0
    #allocation3 [shape = 'u8[262144]{0}', space=vmem, size = 0x40000, scoped, tag = 'input window, operand 3, single buffered']
    #allocation4 [shape = 's32[1]{0}', space=sflag, size = 0x4, scoped, tag = 'scoped memory for tpu_custom_call.1']
    #allocation5 [shape = 'u8[262144]{0}', space=vmem, size = 0x40000, scoped, tag = 'input window, operand 5, single buffered']
    #allocation6 [shape = 's32[1]{0}', space=sflag, size = 0x4, scoped, tag = 'scoped memory for tpu_custom_call.1']
    %18 = vsyncpa [#allocation4], 0
    %19 = vsyncpa [#allocation6], 0
    // Predicated region
    $region2: #{tpu_custom_call.1} parent=1 // pred_check
      _
    $region3: #{tpu_custom_call.1} parent=1 // pred_check_branch
      %21 = sbr.rel (0) target = $region5
    $region4: #{tpu_custom_call.1} parent=1 // pred_region
      _
    $region5: #{tpu_custom_call.1} parent=1 // pred_fallthru
      _
    // Predicated region
    $region6: #{tpu_custom_call.1} parent=1 // pred_check
      _
    $region7: #{tpu_custom_call.1} parent=1 // pred_check_branch
      %23 = sbr.rel (0) target = $region9
    $region8: #{tpu_custom_call.1} parent=1 // pred_region
      _
    $region9: #{tpu_custom_call.1} parent=1 // pred_fallthru
      _
    // Predicated region
    $region10: #{tpu_custom_call.1} parent=1 // pred_check
      _
    $region11: #{tpu_custom_call.1} parent=1 // pred_check_branch
      %25 = sbr.rel (0) target = $region13
    $region12: #{tpu_custom_call.1} parent=1 // pred_region
      _
    $region13: #{tpu_custom_call.1} parent=1 // pred_fallthru
      _
    // Predicated region
    $region14: #{tpu_custom_call.1} parent=1 // pred_check
      _
    $region15: #{tpu_custom_call.1} parent=1 // pred_check_branch
      %27 = sbr.rel (0) target = $region17
    $region16: #{tpu_custom_call.1} parent=1 // pred_region
      %s29 = ssub.s32 8192, 8192
      %30 = vsyncadd [#allocation4], %s29
      %s31 = sshll.u32 [#allocation3], 4
      %s32 = int_to_ptr.vmem [resolvable:$true] %s31
      %37 = dma.hbm_to_vmem [thread:$0]  %s3, 8192, %s32, [#allocation4], 256, 256, 16
    $region17: #{tpu_custom_call.1} parent=1 // pred_fallthru
      _
    // Predicated region
    $region18: #{tpu_custom_call.1} parent=1 // pred_check
      _
    $region19: #{tpu_custom_call.1} parent=1 // pred_check_branch
      %39 = sbr.rel (0) target = $region21
    $region20: #{tpu_custom_call.1} parent=1 // pred_region
      _
    $region21: #{tpu_custom_call.1} parent=1 // pred_fallthru
      _
    // Predicated region
    $region22: #{tpu_custom_call.1} parent=1 // pred_check
      _
    $region23: #{tpu_custom_call.1} parent=1 // pred_check_branch
      %41 = sbr.rel (0) target = $region25
    $region24: #{tpu_custom_call.1} parent=1 // pred_region
      %s43 = ssub.s32 8192, 8192
      %44 = vsyncadd [#allocation6], %s43
      %s45 = sshll.u32 [#allocation5], 4
      %s46 = int_to_ptr.vmem [resolvable:$true] %s45
      %51 = dma.hbm_to_vmem [thread:$0]  %s5, 8192, %s46, [#allocation6], 128, 128, 8
    $region25: #{tpu_custom_call.1} parent=1 // pred_fallthru
      _
    // Predicated region
    $region26: #{tpu_custom_call.1} parent=1 // pred_check
      _
    $region27: #{tpu_custom_call.1} parent=1 // pred_check_branch
      %53 = sbr.rel (0) target = $region29
    $region28: #{tpu_custom_call.1} parent=1 // pred_region
      _
    $region29: #{tpu_custom_call.1} parent=1 // pred_fallthru
      _
    // Predicated region
    $region30: #{tpu_custom_call.1} parent=1 // pred_check
      _
    $region31: #{tpu_custom_call.1} parent=1 // pred_check_branch
      %55 = sbr.rel (0) target = $region33
    $region32: #{tpu_custom_call.1} parent=1 // pred_region
      _
    $region33: #{tpu_custom_call.1} parent=1 // pred_fallthru
      _
    // Predicated region
    $region34: #{tpu_custom_call.1} parent=1 // pred_check
      _
    $region35: #{tpu_custom_call.1} parent=1 // pred_check_branch
      %57 = sbr.rel (0) target = $region37
    $region36: #{tpu_custom_call.1} parent=1 // pred_region
      _
    $region37: #{tpu_custom_call.1} parent=1 // pred_fallthru
      _
    // Predicated region
    $region38: #{tpu_custom_call.1} parent=1 // pred_check
      _
    $region39: #{tpu_custom_call.1} parent=1 // pred_check_branch
      %59 = sbr.rel (0) target = $region41
    $region40: #{tpu_custom_call.1} parent=1 // pred_region
      _
    $region41: #{tpu_custom_call.1} parent=1 // pred_fallthru
      _
    // Predicated region
    $region42: #{tpu_custom_call.1} parent=1 // pred_check
      _
    $region43: #{tpu_custom_call.1} parent=1 // pred_check_branch
      %61 = sbr.rel (0) target = $region45
    $region44: #{tpu_custom_call.1} parent=1 // pred_region
      _
    $region45: #{tpu_custom_call.1} parent=1 // pred_fallthru
      _
    // Predicated region
    $region46: #{tpu_custom_call.1} parent=1 // pred_check
      _
    $region47: #{tpu_custom_call.1} parent=1 // pred_check_branch
      %63 = sbr.rel (0) target = $region49
    $region48: #{tpu_custom_call.1} parent=1 // pred_region
      %64 = dma.done [#allocation4], 8192
    $region49: #{tpu_custom_call.1} parent=1 // pred_fallthru
      _
    // Predicated region
    $region50: #{tpu_custom_call.1} parent=1 // pred_check
      _
    $region51: #{tpu_custom_call.1} parent=1 // pred_check_branch
      %66 = sbr.rel (0) target = $region53
    $region52: #{tpu_custom_call.1} parent=1 // pred_region
      %67 = dma.done [#allocation6], 8192
    $region53: #{tpu_custom_call.1} parent=1 // pred_fallthru
      _
    %v70 = vld [vmem:[%s0] sm:$0xff]
    %v71 = vpack.c.bf16 %v70, %v70
    %v72 = vld [vmem:[%s1] sm:$0xff]
    %v73 = vld [vmem:[%s1 + $0x8] sm:$0xff]
    %v74 = vld [vmem:[%s1 + $0x10] sm:$0xff]
    %v75 = vld [vmem:[%s1 + $0x18] sm:$0xff]
    %v80 = vunpack.c.l.b16 %v72
    %v81 = vunpack.c.h.b16 %v72
    %v82 = vunpack.c.l.b16 %v73
    %v83 = vunpack.c.h.b16 %v73
    %v84 = vunpack.c.l.b16 %v74
    %v85 = vunpack.c.h.b16 %v74
    %v86 = vunpack.c.l.b16 %v75
    %v87 = vunpack.c.h.b16 %v75
    %v88 = vpack.c.b16 %v82, %v80
    %v89 = vpack.c.b16 %v83, %v81
    %v90 = vpack.c.b16 %v86, %v84
    %v91 = vpack.c.b16 %v87, %v85
    %vm96 = vcmask 261120
    %v98 = vsel %vm96, %v71, 0
    %100 = vmatprep.subr.bf16.mxu0 0
    %101 = vmatpush1.bf16.msra.mxu0 0
    %102 = vmatprep.subr.bf16.mxu0 0
    %103 = vmatpush1.bf16.msra.mxu0 0
    %104 = vmatprep.subr.bf16.mxu0 0
    %105 = vmatpush1.bf16.msra.mxu0 0
    %106 = vmatprep.subr.bf16.mxu0 0
    %107 = vmatpush1.bf16.msra.mxu0 0
    %108 = vmatprep.subr.bf16.mxu0 0
    %109 = vmatpush1.bf16.msra.mxu0 0
    %110 = vmatprep.subr.bf16.mxu0 0
    %111 = vmatpush1.bf16.msra.mxu0 0
    %112 = vmatprep.subr.bf16.mxu0 %v91
    %113 = vmatpush1.bf16.msra.mxu0 %v90
    %114 = vmatprep.subr.bf16.mxu0 %v89
    %115 = vmatpush1.bf16.msra.mxu0 %v88
    %116 = vmatprep.subr.bf16.mxu0 0
    %117 = vmatpush2.bf16.msra.mxu0 0
    %118 = vmatprep.subr.bf16.mxu0 0
    %119 = vmatpush2.bf16.msra.mxu0 0
    %120 = vmatprep.subr.bf16.mxu0 0
    %121 = vmatpush2.bf16.msra.mxu0 0
    %122 = vmatprep.subr.bf16.mxu0 0
    %123 = vmatpush2.bf16.msra.mxu0 0
    %124 = vmatprep.subr.bf16.mxu0 0
    %125 = vmatpush2.bf16.msra.mxu0 0
    %126 = vmatprep.subr.bf16.mxu0 0
    %127 = vmatpush2.bf16.msra.mxu0 0
    %128 = vmatprep.subr.bf16.mxu0 0
    %129 = vmatpush2.bf16.msra.mxu0 0
    %130 = vmatprep.subr.bf16.mxu0 0
    %131 = vmatpush2.bf16.msra.mxu0 0
    %132 = vmatprep.mubr.bf16.mxu0 0
    %133 = vmatmul.mubr.bf16.gmra.mxu0 %v98
    %v134 = vpop.f32.mrf.mxu0
    %v135 = vadd.f32 0.0, %v134
    %v136 = vpop.f32.mrf.mxu0
    %v137 = vadd.f32 0.0, %v136
    %v138 = vpop.f32.mrf.mxu0
    %v139 = vpop.f32.mrf.mxu0
    %140 = vdwg.mxu0
    %v141 = vpack.c.bf16 %v135, %v135
    %v142 = vpack.c.bf16 %v137, %v137
    %v143 = vld [vmem:[%s2] sm:$0x3]
    %v146 = vunpack.c.l.s4 1966171168
    %v147 = vunpack.c.0.s8 %v146
    %v148 = vlaneseq
    %v149 = vshrl.u32 %v148, 7
    %v150 = vsub.s32 %v147, %v149
    %v151 = vrot.slane %v143, %v150
    %v152 = vcombine.high %v151, %v151
    %v154 = vunpack.c.l.s4 1966171168
    %v155 = vunpack.c.0.s8 %v154
    %v156 = vlaneseq
    %v157 = vshrl.u32 %v156, 7
    %v158 = vsub.s32 %v155, %v157
    %v159 = vrot.slane %v151, %v158
    %v161 = vunpack.c.l.s4 1966171168
    %v162 = vunpack.c.0.s8 %v161
    %v163 = vlaneseq
    %v164 = vshrl.u32 %v163, 7
    %v165 = vsub.s32 %v162, %v164
    %v166 = vrot.slane %v152, %v165
    %v168 = vpack.i.b16 %v159, %v159
    %v170 = vlaneseq
    %v171 = vshrl.u32 %v170, 7
    %v172 = vsub.s32 0, %v171
    %v173 = vrot.slane %v168, %v172
    %v175 = vpack.i.b16 %v166, %v166
    %v177 = vlaneseq
    %v178 = vshrl.u32 %v177, 7
    %v179 = vsub.s32 0, %v178
    %v180 = vrot.slane %v175, %v179
    %v181 = vadd.bf16 %v141, %v173
    %v182 = vadd.bf16 %v142, %v180
    %v183 = vmul.bf16 %v181, 1009007652
    %v184 = vmul.bf16 %v182, 1009007652
    %v185 = vmax.bf16 %v181, %v183
    %v186 = vmax.bf16 %v182, %v184
    %v187 = vld [vmem:[#allocation3] sm:$0xff]
    %v188 = vld [vmem:[#allocation3 + $0x8] sm:$0xff]
    %v189 = vld [vmem:[#allocation3 + $0x10] sm:$0xff]
    %v190 = vld [vmem:[#allocation3 + $0x18] sm:$0xff]
    %v191 = vld [vmem:[#allocation3 + $0x20] sm:$0xff]
    %v192 = vld [vmem:[#allocation3 + $0x28] sm:$0xff]
    %v193 = vld [vmem:[#allocation3 + $0x30] sm:$0xff]
    %v194 = vld [vmem:[#allocation3 + $0x38] sm:$0xff]
    %v195 = vld [vmem:[#allocation3 + $0x40] sm:$0xff]
    %v196 = vld [vmem:[#allocation3 + $0x48] sm:$0xff]
    %v197 = vld [vmem:[#allocation3 + $0x50] sm:$0xff]
    %v198 = vld [vmem:[#allocation3 + $0x58] sm:$0xff]
    %v199 = vld [vmem:[#allocation3 + $0x60] sm:$0xff]
    %v200 = vld [vmem:[#allocation3 + $0x68] sm:$0xff]
    %v201 = vld [vmem:[#allocation3 + $0x70] sm:$0xff]
    %v202 = vld [vmem:[#allocation3 + $0x78] sm:$0xff]
    %v203 = vld [vmem:[#allocation3 + $0x80] sm:$0xff]
    %v204 = vld [vmem:[#allocation3 + $0x88] sm:$0xff]
    %v205 = vld [vmem:[#allocation3 + $0x90] sm:$0xff]
    %v206 = vld [vmem:[#allocation3 + $0x98] sm:$0xff]
    %v207 = vld [vmem:[#allocation3 + $0xa0] sm:$0xff]
    %v208 = vld [vmem:[#allocation3 + $0xa8] sm:$0xff]
    %v209 = vld [vmem:[#allocation3 + $0xb0] sm:$0xff]
    %v210 = vld [vmem:[#allocation3 + $0xb8] sm:$0xff]
    %v211 = vld [vmem:[#allocation3 + $0xc0] sm:$0xff]
    %v212 = vld [vmem:[#allocation3 + $0xc8] sm:$0xff]
    %v213 = vld [vmem:[#allocation3 + $0xd0] sm:$0xff]
    %v214 = vld [vmem:[#allocation3 + $0xd8] sm:$0xff]
    %v215 = vld [vmem:[#allocation3 + $0xe0] sm:$0xff]
    %v216 = vld [vmem:[#allocation3 + $0xe8] sm:$0xff]
    %v217 = vld [vmem:[#allocation3 + $0xf0] sm:$0xff]
    %v218 = vld [vmem:[#allocation3 + $0xf8] sm:$0xff]
    %v219 = vld [vmem:[#allocation3 + $0x100] sm:$0xff]
    %v220 = vld [vmem:[#allocation3 + $0x108] sm:$0xff]
    %v221 = vld [vmem:[#allocation3 + $0x110] sm:$0xff]
    %v222 = vld [vmem:[#allocation3 + $0x118] sm:$0xff]
    %v223 = vld [vmem:[#allocation3 + $0x120] sm:$0xff]
    %v224 = vld [vmem:[#allocation3 + $0x128] sm:$0xff]
    %v225 = vld [vmem:[#allocation3 + $0x130] sm:$0xff]
    %v226 = vld [vmem:[#allocation3 + $0x138] sm:$0xff]
    %v227 = vld [vmem:[#allocation3 + $0x140] sm:$0xff]
    %v228 = vld [vmem:[#allocation3 + $0x148] sm:$0xff]
    %v229 = vld [vmem:[#allocation3 + $0x150] sm:$0xff]
    %v230 = vld [vmem:[#allocation3 + $0x158] sm:$0xff]
    %v231 = vld [vmem:[#allocation3 + $0x160] sm:$0xff]
    %v232 = vld [vmem:[#allocation3 + $0x168] sm:$0xff]
    %v233 = vld [vmem:[#allocation3 + $0x170] sm:$0xff]
    %v234 = vld [vmem:[#allocation3 + $0x178] sm:$0xff]
    %v235 = vld [vmem:[#allocation3 + $0x180] sm:$0xff]
    %v236 = vld [vmem:[#allocation3 + $0x188] sm:$0xff]
    %v237 = vld [vmem:[#allocation3 + $0x190] sm:$0xff]
    %v238 = vld [vmem:[#allocation3 + $0x198] sm:$0xff]
    %v239 = vld [vmem:[#allocation3 + $0x1a0] sm:$0xff]
    %v240 = vld [vmem:[#allocation3 + $0x1a8] sm:$0xff]
    %v241 = vld [vmem:[#allocation3 + $0x1b0] sm:$0xff]
    %v242 = vld [vmem:[#allocation3 + $0x1b8] sm:$0xff]
    %v243 = vld [vmem:[#allocation3 + $0x1c0] sm:$0xff]
    %v244 = vld [vmem:[#allocation3 + $0x1c8] sm:$0xff]
    %v245 = vld [vmem:[#allocation3 + $0x1d0] sm:$0xff]
    %v246 = vld [vmem:[#allocation3 + $0x1d8] sm:$0xff]
    %v247 = vld [vmem:[#allocation3 + $0x1e0] sm:$0xff]
    %v248 = vld [vmem:[#allocation3 + $0x1e8] sm:$0xff]
    %v249 = vld [vmem:[#allocation3 + $0x1f0] sm:$0xff]
    %v250 = vld [vmem:[#allocation3 + $0x1f8] sm:$0xff]
    %v315 = vunpack.c.l.b16 %v187
    %v316 = vunpack.c.h.b16 %v187
    %v317 = vunpack.c.l.b16 %v188
    %v318 = vunpack.c.h.b16 %v188
    %v319 = vunpack.c.l.b16 %v189
    %v320 = vunpack.c.h.b16 %v189
    %v321 = vunpack.c.l.b16 %v190
    %v322 = vunpack.c.h.b16 %v190
    %v323 = vunpack.c.l.b16 %v191
    %v324 = vunpack.c.h.b16 %v191
    %v325 = vunpack.c.l.b16 %v192
    %v326 = vunpack.c.h.b16 %v192
    %v327 = vunpack.c.l.b16 %v193
    %v328 = vunpack.c.h.b16 %v193
    %v329 = vunpack.c.l.b16 %v194
    %v330 = vunpack.c.h.b16 %v194
    %v331 = vunpack.c.l.b16 %v195
    %v332 = vunpack.c.h.b16 %v195
    %v333 = vunpack.c.l.b16 %v196
    %v334 = vunpack.c.h.b16 %v196
    %v335 = vunpack.c.l.b16 %v197
    %v336 = vunpack.c.h.b16 %v197
    %v337 = vunpack.c.l.b16 %v198
    %v338 = vunpack.c.h.b16 %v198
    %v339 = vunpack.c.l.b16 %v199
    %v340 = vunpack.c.h.b16 %v199
    %v341 = vunpack.c.l.b16 %v200
    %v342 = vunpack.c.h.b16 %v200
    %v343 = vunpack.c.l.b16 %v201
    %v344 = vunpack.c.h.b16 %v201
    %v345 = vunpack.c.l.b16 %v202
    %v346 = vunpack.c.h.b16 %v202
    %v347 = vunpack.c.l.b16 %v203
    %v348 = vunpack.c.h.b16 %v203
    %v349 = vunpack.c.l.b16 %v204
    %v350 = vunpack.c.h.b16 %v204
    %v351 = vunpack.c.l.b16 %v205
    %v352 = vunpack.c.h.b16 %v205
    %v353 = vunpack.c.l.b16 %v206
    %v354 = vunpack.c.h.b16 %v206
    %v355 = vunpack.c.l.b16 %v207
    %v356 = vunpack.c.h.b16 %v207
    %v357 = vunpack.c.l.b16 %v208
    %v358 = vunpack.c.h.b16 %v208
    %v359 = vunpack.c.l.b16 %v209
    %v360 = vunpack.c.h.b16 %v209
    %v361 = vunpack.c.l.b16 %v210
    %v362 = vunpack.c.h.b16 %v210
    %v363 = vunpack.c.l.b16 %v211
    %v364 = vunpack.c.h.b16 %v211
    %v365 = vunpack.c.l.b16 %v212
    %v366 = vunpack.c.h.b16 %v212
    %v367 = vunpack.c.l.b16 %v213
    %v368 = vunpack.c.h.b16 %v213
    %v369 = vunpack.c.l.b16 %v214
    %v370 = vunpack.c.h.b16 %v214
    %v371 = vunpack.c.l.b16 %v215
    %v372 = vunpack.c.h.b16 %v215
    %v373 = vunpack.c.l.b16 %v216
    %v374 = vunpack.c.h.b16 %v216
    %v375 = vunpack.c.l.b16 %v217
    %v376 = vunpack.c.h.b16 %v217
    %v377 = vunpack.c.l.b16 %v218
    %v378 = vunpack.c.h.b16 %v218
    %v379 = vunpack.c.l.b16 %v219
    %v380 = vunpack.c.h.b16 %v219
    %v381 = vunpack.c.l.b16 %v220
    %v382 = vunpack.c.h.b16 %v220
    %v383 = vunpack.c.l.b16 %v221
    %v384 = vunpack.c.h.b16 %v221
    %v385 = vunpack.c.l.b16 %v222
    %v386 = vunpack.c.h.b16 %v222
    %v387 = vunpack.c.l.b16 %v223
    %v388 = vunpack.c.h.b16 %v223
    %v389 = vunpack.c.l.b16 %v224
    %v390 = vunpack.c.h.b16 %v224
    %v391 = vunpack.c.l.b16 %v225
    %v392 = vunpack.c.h.b16 %v225
    %v393 = vunpack.c.l.b16 %v226
    %v394 = vunpack.c.h.b16 %v226
    %v395 = vunpack.c.l.b16 %v227
    %v396 = vunpack.c.h.b16 %v227
    %v397 = vunpack.c.l.b16 %v228
    %v398 = vunpack.c.h.b16 %v228
    %v399 = vunpack.c.l.b16 %v229
    %v400 = vunpack.c.h.b16 %v229
    %v401 = vunpack.c.l.b16 %v230
    %v402 = vunpack.c.h.b16 %v230
    %v403 = vunpack.c.l.b16 %v231
    %v404 = vunpack.c.h.b16 %v231
    %v405 = vunpack.c.l.b16 %v232
    %v406 = vunpack.c.h.b16 %v232
    %v407 = vunpack.c.l.b16 %v233
    %v408 = vunpack.c.h.b16 %v233
    %v409 = vunpack.c.l.b16 %v234
    %v410 = vunpack.c.h.b16 %v234
    %v411 = vunpack.c.l.b16 %v235
    %v412 = vunpack.c.h.b16 %v235
    %v413 = vunpack.c.l.b16 %v236
    %v414 = vunpack.c.h.b16 %v236
    %v415 = vunpack.c.l.b16 %v237
    %v416 = vunpack.c.h.b16 %v237
    %v417 = vunpack.c.l.b16 %v238
    %v418 = vunpack.c.h.b16 %v238
    %v419 = vunpack.c.l.b16 %v239
    %v420 = vunpack.c.h.b16 %v239
    %v421 = vunpack.c.l.b16 %v240
    %v422 = vunpack.c.h.b16 %v240
    %v423 = vunpack.c.l.b16 %v241
    %v424 = vunpack.c.h.b16 %v241
    %v425 = vunpack.c.l.b16 %v242
    %v426 = vunpack.c.h.b16 %v242
    %v427 = vunpack.c.l.b16 %v243
    %v428 = vunpack.c.h.b16 %v243
    %v429 = vunpack.c.l.b16 %v244
    %v430 = vunpack.c.h.b16 %v244
    %v431 = vunpack.c.l.b16 %v245
    %v432 = vunpack.c.h.b16 %v245
    %v433 = vunpack.c.l.b16 %v246
    %v434 = vunpack.c.h.b16 %v246
    %v435 = vunpack.c.l.b16 %v247
    %v436 = vunpack.c.h.b16 %v247
    %v437 = vunpack.c.l.b16 %v248
    %v438 = vunpack.c.h.b16 %v248
    %v439 = vunpack.c.l.b16 %v249
    %v440 = vunpack.c.h.b16 %v249
    %v441 = vunpack.c.l.b16 %v250
    %v442 = vunpack.c.h.b16 %v250
    %v443 = vpack.c.b16 %v319, %v315
    %v444 = vpack.c.b16 %v320, %v316
    %v445 = vpack.c.b16 %v321, %v317
    %v446 = vpack.c.b16 %v322, %v318
    %v447 = vpack.c.b16 %v327, %v323
    %v448 = vpack.c.b16 %v328, %v324
    %v449 = vpack.c.b16 %v329, %v325
    %v450 = vpack.c.b16 %v330, %v326
    %v451 = vpack.c.b16 %v335, %v331
    %v452 = vpack.c.b16 %v336, %v332
    %v453 = vpack.c.b16 %v337, %v333
    %v454 = vpack.c.b16 %v338, %v334
    %v455 = vpack.c.b16 %v343, %v339
    %v456 = vpack.c.b16 %v344, %v340
    %v457 = vpack.c.b16 %v345, %v341
    %v458 = vpack.c.b16 %v346, %v342
    %v459 = vpack.c.b16 %v351, %v347
    %v460 = vpack.c.b16 %v352, %v348
    %v461 = vpack.c.b16 %v353, %v349
    %v462 = vpack.c.b16 %v354, %v350
    %v463 = vpack.c.b16 %v359, %v355
    %v464 = vpack.c.b16 %v360, %v356
    %v465 = vpack.c.b16 %v361, %v357
    %v466 = vpack.c.b16 %v362, %v358
    %v467 = vpack.c.b16 %v367, %v363
    %v468 = vpack.c.b16 %v368, %v364
    %v469 = vpack.c.b16 %v369, %v365
    %v470 = vpack.c.b16 %v370, %v366
    %v471 = vpack.c.b16 %v375, %v371
    %v472 = vpack.c.b16 %v376, %v372
    %v473 = vpack.c.b16 %v377, %v373
    %v474 = vpack.c.b16 %v378, %v374
    %v475 = vpack.c.b16 %v383, %v379
    %v476 = vpack.c.b16 %v384, %v380
    %v477 = vpack.c.b16 %v385, %v381
    %v478 = vpack.c.b16 %v386, %v382
    %v479 = vpack.c.b16 %v391, %v387
    %v480 = vpack.c.b16 %v392, %v388
    %v481 = vpack.c.b16 %v393, %v389
    %v482 = vpack.c.b16 %v394, %v390
    %v483 = vpack.c.b16 %v399, %v395
    %v484 = vpack.c.b16 %v400, %v396
    %v485 = vpack.c.b16 %v401, %v397
    %v486 = vpack.c.b16 %v402, %v398
    %v487 = vpack.c.b16 %v407, %v403
    %v488 = vpack.c.b16 %v408, %v404
    %v489 = vpack.c.b16 %v409, %v405
    %v490 = vpack.c.b16 %v410, %v406
    %v491 = vpack.c.b16 %v415, %v411
    %v492 = vpack.c.b16 %v416, %v412
    %v493 = vpack.c.b16 %v417, %v413
    %v494 = vpack.c.b16 %v418, %v414
    %v495 = vpack.c.b16 %v423, %v419
    %v496 = vpack.c.b16 %v424, %v420
    %v497 = vpack.c.b16 %v425, %v421
    %v498 = vpack.c.b16 %v426, %v422
    %v499 = vpack.c.b16 %v431, %v427
    %v500 = vpack.c.b16 %v432, %v428
    %v501 = vpack.c.b16 %v433, %v429
    %v502 = vpack.c.b16 %v434, %v430
    %v503 = vpack.c.b16 %v439, %v435
    %v504 = vpack.c.b16 %v440, %v436
    %v505 = vpack.c.b16 %v441, %v437
    %v506 = vpack.c.b16 %v442, %v438
    %571 = vmatprep.subr.bf16.mxu0 %v472
    %572 = vmatpush1.bf16.msra.mxu0 %v471
    %573 = vmatprep.subr.bf16.mxu0 %v468
    %574 = vmatpush1.bf16.msra.mxu0 %v467
    %575 = vmatprep.subr.bf16.mxu0 %v464
    %576 = vmatpush1.bf16.msra.mxu0 %v463
    %577 = vmatprep.subr.bf16.mxu0 %v460
    %578 = vmatpush1.bf16.msra.mxu0 %v459
    %579 = vmatprep.subr.bf16.mxu0 %v456
    %580 = vmatpush1.bf16.msra.mxu0 %v455
    %581 = vmatprep.subr.bf16.mxu0 %v452
    %582 = vmatpush1.bf16.msra.mxu0 %v451
    %583 = vmatprep.subr.bf16.mxu0 %v448
    %584 = vmatpush1.bf16.msra.mxu0 %v447
    %585 = vmatprep.subr.bf16.mxu0 %v444
    %586 = vmatpush1.bf16.msra.mxu0 %v443
    %587 = vmatprep.subr.bf16.mxu0 %v504
    %588 = vmatpush2.bf16.msra.mxu0 %v503
    %589 = vmatprep.subr.bf16.mxu0 %v500
    %590 = vmatpush2.bf16.msra.mxu0 %v499
    %591 = vmatprep.subr.bf16.mxu0 %v496
    %592 = vmatpush2.bf16.msra.mxu0 %v495
    %593 = vmatprep.subr.bf16.mxu0 %v492
    %594 = vmatpush2.bf16.msra.mxu0 %v491
    %595 = vmatprep.subr.bf16.mxu0 %v488
    %596 = vmatpush2.bf16.msra.mxu0 %v487
    %597 = vmatprep.subr.bf16.mxu0 %v484
    %598 = vmatpush2.bf16.msra.mxu0 %v483
    %599 = vmatprep.subr.bf16.mxu0 %v480
    %600 = vmatpush2.bf16.msra.mxu0 %v479
    %601 = vmatprep.subr.bf16.mxu0 %v476
    %602 = vmatpush2.bf16.msra.mxu0 %v475
    %603 = vmatprep.mubr.bf16.mxu0 %v186
    %604 = vmatmul.mubr.bf16.gmra.mxu0 %v185
    %v605 = vpop.f32.mrf.mxu0
    %v606 = vadd.f32 0.0, %v605
    %v607 = vpop.f32.mrf.mxu0
    %v608 = vadd.f32 0.0, %v607
    %v609 = vpop.f32.mrf.mxu0
    %v610 = vpop.f32.mrf.mxu0
    %611 = vdwg.mxu0
    %612 = vmatprep.subr.bf16.mxu0 %v474
    %613 = vmatpush1.bf16.msra.mxu0 %v473
    %614 = vmatprep.subr.bf16.mxu0 %v470
    %615 = vmatpush1.bf16.msra.mxu0 %v469
    %616 = vmatprep.subr.bf16.mxu0 %v466
    %617 = vmatpush1.bf16.msra.mxu0 %v465
    %618 = vmatprep.subr.bf16.mxu0 %v462
    %619 = vmatpush1.bf16.msra.mxu0 %v461
    %620 = vmatprep.subr.bf16.mxu0 %v458
    %621 = vmatpush1.bf16.msra.mxu0 %v457
    %622 = vmatprep.subr.bf16.mxu0 %v454
    %623 = vmatpush1.bf16.msra.mxu0 %v453
    %624 = vmatprep.subr.bf16.mxu0 %v450
    %625 = vmatpush1.bf16.msra.mxu0 %v449
    %626 = vmatprep.subr.bf16.mxu0 %v446
    %627 = vmatpush1.bf16.msra.mxu0 %v445
    %628 = vmatprep.subr.bf16.mxu0 %v506
    %629 = vmatpush2.bf16.msra.mxu0 %v505
    %630 = vmatprep.subr.bf16.mxu0 %v502
    %631 = vmatpush2.bf16.msra.mxu0 %v501
    %632 = vmatprep.subr.bf16.mxu0 %v498
    %633 = vmatpush2.bf16.msra.mxu0 %v497
    %634 = vmatprep.subr.bf16.mxu0 %v494
    %635 = vmatpush2.bf16.msra.mxu0 %v493
    %636 = vmatprep.subr.bf16.mxu0 %v490
    %637 = vmatpush2.bf16.msra.mxu0 %v489
    %638 = vmatprep.subr.bf16.mxu0 %v486
    %639 = vmatpush2.bf16.msra.mxu0 %v485
    %640 = vmatprep.subr.bf16.mxu0 %v482
    %641 = vmatpush2.bf16.msra.mxu0 %v481
    %642 = vmatprep.subr.bf16.mxu0 %v478
    %643 = vmatpush2.bf16.msra.mxu0 %v477
    %644 = vmatprep.mubr.bf16.mxu0 %v186
    %645 = vmatmul.mubr.bf16.gmra.mxu0 %v185
    %v646 = vpop.f32.mrf.mxu0
    %v647 = vadd.f32 0.0, %v646
    %v648 = vpop.f32.mrf.mxu0
    %v649 = vadd.f32 0.0, %v648
    %v650 = vpop.f32.mrf.mxu0
    %v651 = vpop.f32.mrf.mxu0
    %652 = vdwg.mxu0
    %v653 = vpack.c.bf16 %v606, %v606
    %v654 = vpack.c.bf16 %v608, %v608
    %v655 = vpack.c.bf16 %v647, %v647
    %v656 = vpack.c.bf16 %v649, %v649
    %v657 = vld [vmem:[%s4] sm:$0xf]
    %v660 = vunpack.c.l.s4 1966171168
    %v661 = vunpack.c.0.s8 %v660
    %v662 = vlaneseq
    %v663 = vshrl.u32 %v662, 7
    %v664 = vsub.s32 %v661, %v663
    %v665 = vrot.slane %v657, %v664
    %v666 = vcombine.high %v665, %v665
    %v668 = vunpack.c.l.s4 1966171168
    %v669 = vunpack.c.0.s8 %v668
    %v670 = vlaneseq
    %v671 = vshrl.u32 %v670, 7
    %v672 = vsub.s32 %v669, %v671
    %v673 = vrot.slane %v665, %v672
    %v675 = vunpack.c.l.s4 1966171168
    %v676 = vunpack.c.0.s8 %v675
    %v677 = vlaneseq
    %v678 = vshrl.u32 %v677, 7
    %v679 = vsub.s32 %v676, %v678
    %v680 = vrot.slane %v666, %v679
    %v681 = vcombine.high %v673, %v673
    %v682 = vcombine.high %v680, %v680
    %v684 = vpack.i.b16 %v673, %v673
    %v686 = vlaneseq
    %v687 = vshrl.u32 %v686, 7
    %v688 = vsub.s32 0, %v687
    %v689 = vrot.slane %v684, %v688
    %v691 = vpack.i.b16 %v680, %v680
    %v693 = vlaneseq
    %v694 = vshrl.u32 %v693, 7
    %v695 = vsub.s32 0, %v694
    %v696 = vrot.slane %v691, %v695
    %v698 = vpack.i.b16 %v681, %v681
    %v700 = vlaneseq
    %v701 = vshrl.u32 %v700, 7
    %v702 = vsub.s32 0, %v701
    %v703 = vrot.slane %v698, %v702
    %v705 = vpack.i.b16 %v682, %v682
    %v707 = vlaneseq
    %v708 = vshrl.u32 %v707, 7
    %v709 = vsub.s32 0, %v708
    %v710 = vrot.slane %v705, %v709
    %v711 = vadd.bf16 %v653, %v689
    %v712 = vadd.bf16 %v654, %v696
    %v713 = vadd.bf16 %v655, %v703
    %v714 = vadd.bf16 %v656, %v710
    %v715 = vmul.bf16 %v711, 1009007652
    %v716 = vmul.bf16 %v712, 1009007652
    %v717 = vmul.bf16 %v713, 1009007652
    %v718 = vmul.bf16 %v714, 1009007652
    %v719 = vmax.bf16 %v711, %v715
    %v720 = vmax.bf16 %v712, %v716
    %v721 = vmax.bf16 %v713, %v717
    %v722 = vmax.bf16 %v714, %v718
    %v723 = vld [vmem:[#allocation5] sm:$0xff]
    %v724 = vld [vmem:[#allocation5 + $0x8] sm:$0xff]
    %v725 = vld [vmem:[#allocation5 + $0x10] sm:$0xff]
    %v726 = vld [vmem:[#allocation5 + $0x18] sm:$0xff]
    %v727 = vld [vmem:[#allocation5 + $0x20] sm:$0xff]
    %v728 = vld [vmem:[#allocation5 + $0x28] sm:$0xff]
    %v729 = vld [vmem:[#allocation5 + $0x30] sm:$0xff]
    %v730 = vld [vmem:[#allocation5 + $0x38] sm:$0xff]
    %v731 = vld [vmem:[#allocation5 + $0x40] sm:$0xff]
    %v732 = vld [vmem:[#allocation5 + $0x48] sm:$0xff]
    %v733 = vld [vmem:[#allocation5 + $0x50] sm:$0xff]
    %v734 = vld [vmem:[#allocation5 + $0x58] sm:$0xff]
    %v735 = vld [vmem:[#allocation5 + $0x60] sm:$0xff]
    %v736 = vld [vmem:[#allocation5 + $0x68] sm:$0xff]
    %v737 = vld [vmem:[#allocation5 + $0x70] sm:$0xff]
    %v738 = vld [vmem:[#allocation5 + $0x78] sm:$0xff]
    %v739 = vld [vmem:[#allocation5 + $0x80] sm:$0xff]
    %v740 = vld [vmem:[#allocation5 + $0x88] sm:$0xff]
    %v741 = vld [vmem:[#allocation5 + $0x90] sm:$0xff]
    %v742 = vld [vmem:[#allocation5 + $0x98] sm:$0xff]
    %v743 = vld [vmem:[#allocation5 + $0xa0] sm:$0xff]
    %v744 = vld [vmem:[#allocation5 + $0xa8] sm:$0xff]
    %v745 = vld [vmem:[#allocation5 + $0xb0] sm:$0xff]
    %v746 = vld [vmem:[#allocation5 + $0xb8] sm:$0xff]
    %v747 = vld [vmem:[#allocation5 + $0xc0] sm:$0xff]
    %v748 = vld [vmem:[#allocation5 + $0xc8] sm:$0xff]
    %v749 = vld [vmem:[#allocation5 + $0xd0] sm:$0xff]
    %v750 = vld [vmem:[#allocation5 + $0xd8] sm:$0xff]
    %v751 = vld [vmem:[#allocation5 + $0xe0] sm:$0xff]
    %v752 = vld [vmem:[#allocation5 + $0xe8] sm:$0xff]
    %v753 = vld [vmem:[#allocation5 + $0xf0] sm:$0xff]
    %v754 = vld [vmem:[#allocation5 + $0xf8] sm:$0xff]
    %v755 = vld [vmem:[#allocation5 + $0x100] sm:$0xff]
    %v756 = vld [vmem:[#allocation5 + $0x108] sm:$0xff]
    %v757 = vld [vmem:[#allocation5 + $0x110] sm:$0xff]
    %v758 = vld [vmem:[#allocation5 + $0x118] sm:$0xff]
    %v759 = vld [vmem:[#allocation5 + $0x120] sm:$0xff]
    %v760 = vld [vmem:[#allocation5 + $0x128] sm:$0xff]
    %v761 = vld [vmem:[#allocation5 + $0x130] sm:$0xff]
    %v762 = vld [vmem:[#allocation5 + $0x138] sm:$0xff]
    %v763 = vld [vmem:[#allocation5 + $0x140] sm:$0xff]
    %v764 = vld [vmem:[#allocation5 + $0x148] sm:$0xff]
    %v765 = vld [vmem:[#allocation5 + $0x150] sm:$0xff]
    %v766 = vld [vmem:[#allocation5 + $0x158] sm:$0xff]
    %v767 = vld [vmem:[#allocation5 + $0x160] sm:$0xff]
    %v768 = vld [vmem:[#allocation5 + $0x168] sm:$0xff]
    %v769 = vld [vmem:[#allocation5 + $0x170] sm:$0xff]
    %v770 = vld [vmem:[#allocation5 + $0x178] sm:$0xff]
    %v771 = vld [vmem:[#allocation5 + $0x180] sm:$0xff]
    %v772 = vld [vmem:[#allocation5 + $0x188] sm:$0xff]
    %v773 = vld [vmem:[#allocation5 + $0x190] sm:$0xff]
    %v774 = vld [vmem:[#allocation5 + $0x198] sm:$0xff]
    %v775 = vld [vmem:[#allocation5 + $0x1a0] sm:$0xff]
    %v776 = vld [vmem:[#allocation5 + $0x1a8] sm:$0xff]
    %v777 = vld [vmem:[#allocation5 + $0x1b0] sm:$0xff]
    %v778 = vld [vmem:[#allocation5 + $0x1b8] sm:$0xff]
    %v779 = vld [vmem:[#allocation5 + $0x1c0] sm:$0xff]
    %v780 = vld [vmem:[#allocation5 + $0x1c8] sm:$0xff]
    %v781 = vld [vmem:[#allocation5 + $0x1d0] sm:$0xff]
    %v782 = vld [vmem:[#allocation5 + $0x1d8] sm:$0xff]
    %v783 = vld [vmem:[#allocation5 + $0x1e0] sm:$0xff]
    %v784 = vld [vmem:[#allocation5 + $0x1e8] sm:$0xff]
    %v785 = vld [vmem:[#allocation5 + $0x1f0] sm:$0xff]
    %v786 = vld [vmem:[#allocation5 + $0x1f8] sm:$0xff]
    %v851 = vunpack.c.l.b16 %v723
    %v852 = vunpack.c.h.b16 %v723
    %v853 = vunpack.c.l.b16 %v724
    %v854 = vunpack.c.h.b16 %v724
    %v855 = vunpack.c.l.b16 %v725
    %v856 = vunpack.c.h.b16 %v725
    %v857 = vunpack.c.l.b16 %v726
    %v858 = vunpack.c.h.b16 %v726
    %v859 = vunpack.c.l.b16 %v727
    %v860 = vunpack.c.h.b16 %v727
    %v861 = vunpack.c.l.b16 %v728
    %v862 = vunpack.c.h.b16 %v728
    %v863 = vunpack.c.l.b16 %v729
    %v864 = vunpack.c.h.b16 %v729
    %v865 = vunpack.c.l.b16 %v730
    %v866 = vunpack.c.h.b16 %v730
    %v867 = vunpack.c.l.b16 %v731
    %v868 = vunpack.c.h.b16 %v731
    %v869 = vunpack.c.l.b16 %v732
    %v870 = vunpack.c.h.b16 %v732
    %v871 = vunpack.c.l.b16 %v733
    %v872 = vunpack.c.h.b16 %v733
    %v873 = vunpack.c.l.b16 %v734
    %v874 = vunpack.c.h.b16 %v734
    %v875 = vunpack.c.l.b16 %v735
    %v876 = vunpack.c.h.b16 %v735
    %v877 = vunpack.c.l.b16 %v736
    %v878 = vunpack.c.h.b16 %v736
    %v879 = vunpack.c.l.b16 %v737
    %v880 = vunpack.c.h.b16 %v737
    %v881 = vunpack.c.l.b16 %v738
    %v882 = vunpack.c.h.b16 %v738
    %v883 = vunpack.c.l.b16 %v739
    %v884 = vunpack.c.h.b16 %v739
    %v885 = vunpack.c.l.b16 %v740
    %v886 = vunpack.c.h.b16 %v740
    %v887 = vunpack.c.l.b16 %v741
    %v888 = vunpack.c.h.b16 %v741
    %v889 = vunpack.c.l.b16 %v742
    %v890 = vunpack.c.h.b16 %v742
    %v891 = vunpack.c.l.b16 %v743
    %v892 = vunpack.c.h.b16 %v743
    %v893 = vunpack.c.l.b16 %v744
    %v894 = vunpack.c.h.b16 %v744
    %v895 = vunpack.c.l.b16 %v745
    %v896 = vunpack.c.h.b16 %v745
    %v897 = vunpack.c.l.b16 %v746
    %v898 = vunpack.c.h.b16 %v746
    %v899 = vunpack.c.l.b16 %v747
    %v900 = vunpack.c.h.b16 %v747
    %v901 = vunpack.c.l.b16 %v748
    %v902 = vunpack.c.h.b16 %v748
    %v903 = vunpack.c.l.b16 %v749
    %v904 = vunpack.c.h.b16 %v749
    %v905 = vunpack.c.l.b16 %v750
    %v906 = vunpack.c.h.b16 %v750
    %v907 = vunpack.c.l.b16 %v751
    %v908 = vunpack.c.h.b16 %v751
    %v909 = vunpack.c.l.b16 %v752
    %v910 = vunpack.c.h.b16 %v752
    %v911 = vunpack.c.l.b16 %v753
    %v912 = vunpack.c.h.b16 %v753
    %v913 = vunpack.c.l.b16 %v754
    %v914 = vunpack.c.h.b16 %v754
    %v915 = vunpack.c.l.b16 %v755
    %v916 = vunpack.c.h.b16 %v755
    %v917 = vunpack.c.l.b16 %v756
    %v918 = vunpack.c.h.b16 %v756
    %v919 = vunpack.c.l.b16 %v757
    %v920 = vunpack.c.h.b16 %v757
    %v921 = vunpack.c.l.b16 %v758
    %v922 = vunpack.c.h.b16 %v758
    %v923 = vunpack.c.l.b16 %v759
    %v924 = vunpack.c.h.b16 %v759
    %v925 = vunpack.c.l.b16 %v760
    %v926 = vunpack.c.h.b16 %v760
    %v927 = vunpack.c.l.b16 %v761
    %v928 = vunpack.c.h.b16 %v761
    %v929 = vunpack.c.l.b16 %v762
    %v930 = vunpack.c.h.b16 %v762
    %v931 = vunpack.c.l.b16 %v763
    %v932 = vunpack.c.h.b16 %v763
    %v933 = vunpack.c.l.b16 %v764
    %v934 = vunpack.c.h.b16 %v764
    %v935 = vunpack.c.l.b16 %v765
    %v936 = vunpack.c.h.b16 %v765
    %v937 = vunpack.c.l.b16 %v766
    %v938 = vunpack.c.h.b16 %v766
    %v939 = vunpack.c.l.b16 %v767
    %v940 = vunpack.c.h.b16 %v767
    %v941 = vunpack.c.l.b16 %v768
    %v942 = vunpack.c.h.b16 %v768
    %v943 = vunpack.c.l.b16 %v769
    %v944 = vunpack.c.h.b16 %v769
    %v945 = vunpack.c.l.b16 %v770
    %v946 = vunpack.c.h.b16 %v770
    %v947 = vunpack.c.l.b16 %v771
    %v948 = vunpack.c.h.b16 %v771
    %v949 = vunpack.c.l.b16 %v772
    %v950 = vunpack.c.h.b16 %v772
    %v951 = vunpack.c.l.b16 %v773
    %v952 = vunpack.c.h.b16 %v773
    %v953 = vunpack.c.l.b16 %v774
    %v954 = vunpack.c.h.b16 %v774
    %v955 = vunpack.c.l.b16 %v775
    %v956 = vunpack.c.h.b16 %v775
    %v957 = vunpack.c.l.b16 %v776
    %v958 = vunpack.c.h.b16 %v776
    %v959 = vunpack.c.l.b16 %v777
    %v960 = vunpack.c.h.b16 %v777
    %v961 = vunpack.c.l.b16 %v778
    %v962 = vunpack.c.h.b16 %v778
    %v963 = vunpack.c.l.b16 %v779
    %v964 = vunpack.c.h.b16 %v779
    %v965 = vunpack.c.l.b16 %v780
    %v966 = vunpack.c.h.b16 %v780
    %v967 = vunpack.c.l.b16 %v781
    %v968 = vunpack.c.h.b16 %v781
    %v969 = vunpack.c.l.b16 %v782
    %v970 = vunpack.c.h.b16 %v782
    %v971 = vunpack.c.l.b16 %v783
    %v972 = vunpack.c.h.b16 %v783
    %v973 = vunpack.c.l.b16 %v784
    %v974 = vunpack.c.h.b16 %v784
    %v975 = vunpack.c.l.b16 %v785
    %v976 = vunpack.c.h.b16 %v785
    %v977 = vunpack.c.l.b16 %v786
    %v978 = vunpack.c.h.b16 %v786
    %v979 = vpack.c.b16 %v853, %v851
    %v980 = vpack.c.b16 %v854, %v852
    %v981 = vpack.c.b16 %v857, %v855
    %v982 = vpack.c.b16 %v858, %v856
    %v983 = vpack.c.b16 %v861, %v859
    %v984 = vpack.c.b16 %v862, %v860
    %v985 = vpack.c.b16 %v865, %v863
    %v986 = vpack.c.b16 %v866, %v864
    %v987 = vpack.c.b16 %v869, %v867
    %v988 = vpack.c.b16 %v870, %v868
    %v989 = vpack.c.b16 %v873, %v871
    %v990 = vpack.c.b16 %v874, %v872
    %v991 = vpack.c.b16 %v877, %v875
    %v992 = vpack.c.b16 %v878, %v876
    %v993 = vpack.c.b16 %v881, %v879
    %v994 = vpack.c.b16 %v882, %v880
    %v995 = vpack.c.b16 %v885, %v883
    %v996 = vpack.c.b16 %v886, %v884
    %v997 = vpack.c.b16 %v889, %v887
    %v998 = vpack.c.b16 %v890, %v888
    %v999 = vpack.c.b16 %v893, %v891
    %v1000 = vpack.c.b16 %v894, %v892
    %v1001 = vpack.c.b16 %v897, %v895
    %v1002 = vpack.c.b16 %v898, %v896
    %v1003 = vpack.c.b16 %v901, %v899
    %v1004 = vpack.c.b16 %v902, %v900
    %v1005 = vpack.c.b16 %v905, %v903
    %v1006 = vpack.c.b16 %v906, %v904
    %v1007 = vpack.c.b16 %v909, %v907
    %v1008 = vpack.c.b16 %v910, %v908
    %v1009 = vpack.c.b16 %v913, %v911
    %v1010 = vpack.c.b16 %v914, %v912
    %v1011 = vpack.c.b16 %v917, %v915
    %v1012 = vpack.c.b16 %v918, %v916
    %v1013 = vpack.c.b16 %v921, %v919
    %v1014 = vpack.c.b16 %v922, %v920
    %v1015 = vpack.c.b16 %v925, %v923
    %v1016 = vpack.c.b16 %v926, %v924
    %v1017 = vpack.c.b16 %v929, %v927
    %v1018 = vpack.c.b16 %v930, %v928
    %v1019 = vpack.c.b16 %v933, %v931
    %v1020 = vpack.c.b16 %v934, %v932
    %v1021 = vpack.c.b16 %v937, %v935
    %v1022 = vpack.c.b16 %v938, %v936
    %v1023 = vpack.c.b16 %v941, %v939
    %v1024 = vpack.c.b16 %v942, %v940
    %v1025 = vpack.c.b16 %v945, %v943
    %v1026 = vpack.c.b16 %v946, %v944
    %v1027 = vpack.c.b16 %v949, %v947
    %v1028 = vpack.c.b16 %v950, %v948
    %v1029 = vpack.c.b16 %v953, %v951
    %v1030 = vpack.c.b16 %v954, %v952
    %v1031 = vpack.c.b16 %v957, %v955
    %v1032 = vpack.c.b16 %v958, %v956
    %v1033 = vpack.c.b16 %v961, %v959
    %v1034 = vpack.c.b16 %v962, %v960
    %v1035 = vpack.c.b16 %v965, %v963
    %v1036 = vpack.c.b16 %v966, %v964
    %v1037 = vpack.c.b16 %v969, %v967
    %v1038 = vpack.c.b16 %v970, %v968
    %v1039 = vpack.c.b16 %v973, %v971
    %v1040 = vpack.c.b16 %v974, %v972
    %v1041 = vpack.c.b16 %v977, %v975
    %v1042 = vpack.c.b16 %v978, %v976
    %1107 = vmatprep.subr.bf16.mxu0 %v994
    %1108 = vmatpush1.bf16.msra.mxu0 %v993
    %1109 = vmatprep.subr.bf16.mxu0 %v992
    %1110 = vmatpush1.bf16.msra.mxu0 %v991
    %1111 = vmatprep.subr.bf16.mxu0 %v990
    %1112 = vmatpush1.bf16.msra.mxu0 %v989
    %1113 = vmatprep.subr.bf16.mxu0 %v988
    %1114 = vmatpush1.bf16.msra.mxu0 %v987
    %1115 = vmatprep.subr.bf16.mxu0 %v986
    %1116 = vmatpush1.bf16.msra.mxu0 %v985
    %1117 = vmatprep.subr.bf16.mxu0 %v984
    %1118 = vmatpush1.bf16.msra.mxu0 %v983
    %1119 = vmatprep.subr.bf16.mxu0 %v982
    %1120 = vmatpush1.bf16.msra.mxu0 %v981
    %1121 = vmatprep.subr.bf16.mxu0 %v980
    %1122 = vmatpush1.bf16.msra.mxu0 %v979
    %1123 = vmatprep.subr.bf16.mxu0 %v1010
    %1124 = vmatpush2.bf16.msra.mxu0 %v1009
    %1125 = vmatprep.subr.bf16.mxu0 %v1008
    %1126 = vmatpush2.bf16.msra.mxu0 %v1007
    %1127 = vmatprep.subr.bf16.mxu0 %v1006
    %1128 = vmatpush2.bf16.msra.mxu0 %v1005
    %1129 = vmatprep.subr.bf16.mxu0 %v1004
    %1130 = vmatpush2.bf16.msra.mxu0 %v1003
    %1131 = vmatprep.subr.bf16.mxu0 %v1002
    %1132 = vmatpush2.bf16.msra.mxu0 %v1001
    %1133 = vmatprep.subr.bf16.mxu0 %v1000
    %1134 = vmatpush2.bf16.msra.mxu0 %v999
    %1135 = vmatprep.subr.bf16.mxu0 %v998
    %1136 = vmatpush2.bf16.msra.mxu0 %v997
    %1137 = vmatprep.subr.bf16.mxu0 %v996
    %1138 = vmatpush2.bf16.msra.mxu0 %v995
    %1139 = vmatprep.mubr.bf16.mxu0 %v720
    %1140 = vmatmul.mubr.bf16.gmra.mxu0 %v719
    %v1141 = vpop.f32.mrf.mxu0
    %v1142 = vadd.f32 0.0, %v1141
    %v1143 = vpop.f32.mrf.mxu0
    %v1144 = vadd.f32 0.0, %v1143
    %v1145 = vpop.f32.mrf.mxu0
    %v1146 = vpop.f32.mrf.mxu0
    %1147 = vdwg.mxu0
    %1148 = vmatprep.subr.bf16.mxu0 %v1026
    %1149 = vmatpush1.bf16.msra.mxu0 %v1025
    %1150 = vmatprep.subr.bf16.mxu0 %v1024
    %1151 = vmatpush1.bf16.msra.mxu0 %v1023
    %1152 = vmatprep.subr.bf16.mxu0 %v1022
    %1153 = vmatpush1.bf16.msra.mxu0 %v1021
    %1154 = vmatprep.subr.bf16.mxu0 %v1020
    %1155 = vmatpush1.bf16.msra.mxu0 %v1019
    %1156 = vmatprep.subr.bf16.mxu0 %v1018
    %1157 = vmatpush1.bf16.msra.mxu0 %v1017
    %1158 = vmatprep.subr.bf16.mxu0 %v1016
    %1159 = vmatpush1.bf16.msra.mxu0 %v1015
    %1160 = vmatprep.subr.bf16.mxu0 %v1014
    %1161 = vmatpush1.bf16.msra.mxu0 %v1013
    %1162 = vmatprep.subr.bf16.mxu0 %v1012
    %1163 = vmatpush1.bf16.msra.mxu0 %v1011
    %1164 = vmatprep.subr.bf16.mxu0 %v1042
    %1165 = vmatpush2.bf16.msra.mxu0 %v1041
    %1166 = vmatprep.subr.bf16.mxu0 %v1040
    %1167 = vmatpush2.bf16.msra.mxu0 %v1039
    %1168 = vmatprep.subr.bf16.mxu0 %v1038
    %1169 = vmatpush2.bf16.msra.mxu0 %v1037
    %1170 = vmatprep.subr.bf16.mxu0 %v1036
    %1171 = vmatpush2.bf16.msra.mxu0 %v1035
    %1172 = vmatprep.subr.bf16.mxu0 %v1034
    %1173 = vmatpush2.bf16.msra.mxu0 %v1033
    %1174 = vmatprep.subr.bf16.mxu0 %v1032
    %1175 = vmatpush2.bf16.msra.mxu0 %v1031
    %1176 = vmatprep.subr.bf16.mxu0 %v1030
    %1177 = vmatpush2.bf16.msra.mxu0 %v1029
    %1178 = vmatprep.subr.bf16.mxu0 %v1028
    %1179 = vmatpush2.bf16.msra.mxu0 %v1027
    %1180 = vmatprep.mubr.bf16.mxu0 %v722
    %1181 = vmatmul.mubr.bf16.gmra.mxu0 %v721
    %v1182 = vpop.f32.mrf.mxu0
    %v1183 = vadd.f32 %v1142, %v1182
    %v1184 = vpop.f32.mrf.mxu0
    %v1185 = vadd.f32 %v1144, %v1184
    %v1186 = vpop.f32.mrf.mxu0
    %v1187 = vpop.f32.mrf.mxu0
    %1188 = vdwg.mxu0
    %v1189 = vpack.c.bf16 %v1183, %v1183
    %v1190 = vpack.c.bf16 %v1185, %v1185
    %v1191 = vld [vmem:[%s6] sm:$0x3]
    %v1194 = vunpack.c.l.s4 1966171168
    %v1195 = vunpack.c.0.s8 %v1194
    %v1196 = vlaneseq
    %v1197 = vshrl.u32 %v1196, 7
    %v1198 = vsub.s32 %v1195, %v1197
    %v1199 = vrot.slane %v1191, %v1198
    %v1200 = vcombine.high %v1199, %v1199
    %v1202 = vunpack.c.l.s4 1966171168
    %v1203 = vunpack.c.0.s8 %v1202
    %v1204 = vlaneseq
    %v1205 = vshrl.u32 %v1204, 7
    %v1206 = vsub.s32 %v1203, %v1205
    %v1207 = vrot.slane %v1199, %v1206
    %v1209 = vunpack.c.l.s4 1966171168
    %v1210 = vunpack.c.0.s8 %v1209
    %v1211 = vlaneseq
    %v1212 = vshrl.u32 %v1211, 7
    %v1213 = vsub.s32 %v1210, %v1212
    %v1214 = vrot.slane %v1200, %v1213
    %v1216 = vpack.i.b16 %v1207, %v1207
    %v1218 = vlaneseq
    %v1219 = vshrl.u32 %v1218, 7
    %v1220 = vsub.s32 0, %v1219
    %v1221 = vrot.slane %v1216, %v1220
    %v1223 = vpack.i.b16 %v1214, %v1214
    %v1225 = vlaneseq
    %v1226 = vshrl.u32 %v1225, 7
    %v1227 = vsub.s32 0, %v1226
    %v1228 = vrot.slane %v1223, %v1227
    %v1229 = vadd.bf16 %v1189, %v1221
    %v1230 = vadd.bf16 %v1190, %v1228
    %v1231 = vmul.bf16 %v1229, 1009007652
    %v1232 = vmul.bf16 %v1230, 1009007652
    %v1233 = vmax.bf16 %v1229, %v1231
    %v1234 = vmax.bf16 %v1230, %v1232
    %v1235 = vld [vmem:[%s7] sm:$0xf]
    %v1236 = vld [vmem:[%s7 + $0x4] sm:$0xf]
    %v1237 = vld [vmem:[%s7 + $0x8] sm:$0xf]
    %v1238 = vld [vmem:[%s7 + $0xc] sm:$0xf]
    %v1239 = vld [vmem:[%s7 + $0x10] sm:$0xf]
    %v1240 = vld [vmem:[%s7 + $0x14] sm:$0xf]
    %v1241 = vld [vmem:[%s7 + $0x18] sm:$0xf]
    %v1242 = vld [vmem:[%s7 + $0x1c] sm:$0xf]
    %v1243 = vld [vmem:[%s7 + $0x20] sm:$0xf]
    %v1244 = vld [vmem:[%s7 + $0x24] sm:$0xf]
    %v1245 = vld [vmem:[%s7 + $0x28] sm:$0xf]
    %v1246 = vld [vmem:[%s7 + $0x2c] sm:$0xf]
    %v1247 = vld [vmem:[%s7 + $0x30] sm:$0xf]
    %v1248 = vld [vmem:[%s7 + $0x34] sm:$0xf]
    %v1249 = vld [vmem:[%s7 + $0x38] sm:$0xf]
    %v1250 = vld [vmem:[%s7 + $0x3c] sm:$0xf]
    %v1251 = vld [vmem:[%s7 + $0x40] sm:$0xf]
    %v1252 = vld [vmem:[%s7 + $0x44] sm:$0xf]
    %v1253 = vld [vmem:[%s7 + $0x48] sm:$0xf]
    %v1254 = vld [vmem:[%s7 + $0x4c] sm:$0xf]
    %v1255 = vld [vmem:[%s7 + $0x50] sm:$0xf]
    %v1256 = vld [vmem:[%s7 + $0x54] sm:$0xf]
    %v1257 = vld [vmem:[%s7 + $0x58] sm:$0xf]
    %v1258 = vld [vmem:[%s7 + $0x5c] sm:$0xf]
    %v1259 = vld [vmem:[%s7 + $0x60] sm:$0xf]
    %v1260 = vld [vmem:[%s7 + $0x64] sm:$0xf]
    %v1261 = vld [vmem:[%s7 + $0x68] sm:$0xf]
    %v1262 = vld [vmem:[%s7 + $0x6c] sm:$0xf]
    %v1263 = vld [vmem:[%s7 + $0x70] sm:$0xf]
    %v1264 = vld [vmem:[%s7 + $0x74] sm:$0xf]
    %v1265 = vld [vmem:[%s7 + $0x78] sm:$0xf]
    %v1266 = vld [vmem:[%s7 + $0x7c] sm:$0xf]
    %v1267 = vld [vmem:[%s8] sm:$0x1]
    %v1269 = vlaneseq
    %v1270 = vshrl.u32 %v1269, 7
    %v1271 = vsub.s32 0, %v1270
    %v1272 = vrot.slane %v1267, %v1271
    %v1306 = vunpack.c.l.b16 %v1235
    %v1307 = vunpack.c.l.b16 %v1236
    %v1308 = vunpack.c.l.b16 %v1237
    %v1309 = vunpack.c.l.b16 %v1238
    %v1310 = vunpack.c.l.b16 %v1239
    %v1311 = vunpack.c.l.b16 %v1240
    %v1312 = vunpack.c.l.b16 %v1241
    %v1313 = vunpack.c.l.b16 %v1242
    %v1314 = vunpack.c.l.b16 %v1243
    %v1315 = vunpack.c.l.b16 %v1244
    %v1316 = vunpack.c.l.b16 %v1245
    %v1317 = vunpack.c.l.b16 %v1246
    %v1318 = vunpack.c.l.b16 %v1247
    %v1319 = vunpack.c.l.b16 %v1248
    %v1320 = vunpack.c.l.b16 %v1249
    %v1321 = vunpack.c.l.b16 %v1250
    %v1322 = vunpack.c.l.b16 %v1251
    %v1323 = vunpack.c.l.b16 %v1252
    %v1324 = vunpack.c.l.b16 %v1253
    %v1325 = vunpack.c.l.b16 %v1254
    %v1326 = vunpack.c.l.b16 %v1255
    %v1327 = vunpack.c.l.b16 %v1256
    %v1328 = vunpack.c.l.b16 %v1257
    %v1329 = vunpack.c.l.b16 %v1258
    %v1330 = vunpack.c.l.b16 %v1259
    %v1331 = vunpack.c.l.b16 %v1260
    %v1332 = vunpack.c.l.b16 %v1261
    %v1333 = vunpack.c.l.b16 %v1262
    %v1334 = vunpack.c.l.b16 %v1263
    %v1335 = vunpack.c.l.b16 %v1264
    %v1336 = vunpack.c.l.b16 %v1265
    %v1337 = vunpack.c.l.b16 %v1266
    %v1338 = vpack.c.b16 %v1307, %v1306
    %v1339 = vpack.c.b16 %v1309, %v1308
    %v1340 = vpack.c.b16 %v1311, %v1310
    %v1341 = vpack.c.b16 %v1313, %v1312
    %v1342 = vpack.c.b16 %v1315, %v1314
    %v1343 = vpack.c.b16 %v1317, %v1316
    %v1344 = vpack.c.b16 %v1319, %v1318
    %v1345 = vpack.c.b16 %v1321, %v1320
    %v1346 = vpack.c.b16 %v1323, %v1322
    %v1347 = vpack.c.b16 %v1325, %v1324
    %v1348 = vpack.c.b16 %v1327, %v1326
    %v1349 = vpack.c.b16 %v1329, %v1328
    %v1350 = vpack.c.b16 %v1331, %v1330
    %v1351 = vpack.c.b16 %v1333, %v1332
    %v1352 = vpack.c.b16 %v1335, %v1334
    %v1353 = vpack.c.b16 %v1337, %v1336
    %1370 = vmatprep.subr.bf16.mxu0 0
    %1371 = vmatpush1.bf16.msra.mxu0 %v1345
    %1372 = vmatprep.subr.bf16.mxu0 0
    %1373 = vmatpush1.bf16.msra.mxu0 %v1344
    %1374 = vmatprep.subr.bf16.mxu0 0
    %1375 = vmatpush1.bf16.msra.mxu0 %v1343
    %1376 = vmatprep.subr.bf16.mxu0 0
    %1377 = vmatpush1.bf16.msra.mxu0 %v1342
    %1378 = vmatprep.subr.bf16.mxu0 0
    %1379 = vmatpush1.bf16.msra.mxu0 %v1341
    %1380 = vmatprep.subr.bf16.mxu0 0
    %1381 = vmatpush1.bf16.msra.mxu0 %v1340
    %1382 = vmatprep.subr.bf16.mxu0 0
    %1383 = vmatpush1.bf16.msra.mxu0 %v1339
    %1384 = vmatprep.subr.bf16.mxu0 0
    %1385 = vmatpush1.bf16.msra.mxu0 %v1338
    %1386 = vmatprep.subr.bf16.mxu0 0
    %1387 = vmatpush2.bf16.msra.mxu0 %v1353
    %1388 = vmatprep.subr.bf16.mxu0 0
    %1389 = vmatpush2.bf16.msra.mxu0 %v1352
    %1390 = vmatprep.subr.bf16.mxu0 0
    %1391 = vmatpush2.bf16.msra.mxu0 %v1351
    %1392 = vmatprep.subr.bf16.mxu0 0
    %1393 = vmatpush2.bf16.msra.mxu0 %v1350
    %1394 = vmatprep.subr.bf16.mxu0 0
    %1395 = vmatpush2.bf16.msra.mxu0 %v1349
    %1396 = vmatprep.subr.bf16.mxu0 0
    %1397 = vmatpush2.bf16.msra.mxu0 %v1348
    %1398 = vmatprep.subr.bf16.mxu0 0
    %1399 = vmatpush2.bf16.msra.mxu0 %v1347
    %1400 = vmatprep.subr.bf16.mxu0 0
    %1401 = vmatpush2.bf16.msra.mxu0 %v1346
    %1402 = vmatprep.mubr.bf16.mxu0 %v1234
    %1403 = vmatmul.mubr.bf16.gmra.mxu0 %v1233
    %v1404 = vpop.f32.mrf.mxu0
    %v1405 = vadd.f32 %v1272, %v1404
    %v1406 = vpop.f32.mrf.mxu0
    %v1407 = vpop.f32.mrf.mxu0
    %v1408 = vpop.f32.mrf.mxu0
    %1409 = vdwg.mxu0
    %v1410 = vmul.f32 %v1405, 0.01
    %v1411 = vmax.f32 %v1405, %v1410
    %v1412 = vld [vmem:[%s9] sm:$0x1]
    %v1414 = vlaneseq
    %v1415 = vshrl.u32 %v1414, 7
    %v1416 = vsub.s32 0, %v1415
    %v1417 = vrot.slane %v1412, %v1416
    %v1419 = vmul.f32 %v1411, %v1417
    %vm1420 = vcmask 523264
    %v1421 = vsel %vm1420, %v1419, 0.0
    %1422 = vadd.xlane.f32.xlu0 %v1421
    %v1423 = vpop.xlane.xlu0 %1422
    %v1424 = vld [vmem:[#allocation2] sm:$0x1]
    %v1426 = vlaneseq
    %v1427 = vshrl.u32 %v1426, 7
    %v1428 = vsub.s32 0, %v1427
    %v1429 = vrot.slane %v1424, %v1428
    %v1431 = vadd.f32 %v1423, %v1429
    %vm1432 = vcmask 7168
    %1433 = vst.msk [vmem:[%s11] sm:$0xff] %vm1432, %v1431
    // Predicated region
    $region54: #{tpu_custom_call.1} parent=1 // pred_check
      _
    $region55: #{tpu_custom_call.1} parent=1 // pred_check_branch
      %1435 = sbr.rel (0) target = $region57
    $region56: #{tpu_custom_call.1} parent=1 // pred_region
      _
    $region57: #{tpu_custom_call.1} parent=1 // pred_fallthru
      _
    // Predicated region
    $region58: #{tpu_custom_call.1} parent=1 // pred_check
      _
    $region59: #{tpu_custom_call.1} parent=1 // pred_check_branch
      %1437 = sbr.rel (0) target = $region61
    $region60: #{tpu_custom_call.1} parent=1 // pred_region
      _
    $region61: #{tpu_custom_call.1} parent=1 // pred_fallthru
      _
    %1438 = vsyncpa [#allocation4], 1
    %1439 = vsyncpa [#allocation6], 1

</llo_original>
